<compile_context>
chip_gen: v6e
topology: v6e:2x2x1
jax: 0.10.0
libtpu: 0.0.40
codegen_flags: <defaults>
</compile_context>

<pallas_src>
import numpy as np
import jax
import jax.numpy as jnp
from jax import lax
from jax.experimental import pallas as pl
from jax.experimental.pallas import tpu as pltpu


def tq_np(f_bin, fs, fft_bins):
    """Threshold-in-quiet curve (same formula as the torch module's tq())."""
    f = (np.asarray(f_bin, dtype=np.float64) + 1) * fs / fft_bins
    th = (3.64 * (f / 1000 + 1e-06) ** (-0.8)
          - 6.5 * np.exp(-0.6 * (f / 1000 - 3.3) ** 2)
          + 1e-3 * (f / 1000) ** 4)
    return th


def _round_up(x, m):
    return (x + m - 1) // m * m


def _vmem_budget_bytes():
    """Generation-aware cap for vmem_limit_bytes (v7x has only 64 MiB per TC)."""
    kind = ""
    try:
        kind = jax.devices()[0].device_kind.lower()
    except Exception:
        pass
    return (48 << 20) if "v7" in kind else (96 << 20)


def _vmem_need_bytes(tbt, f_pad, stream_itemsize_sum, w_bytes):
    stream = 2 * tbt * f_pad * stream_itemsize_sum      # double-buffered lm/re/im
    pinned = 2 * (w_bytes + 8 * f_pad * 4)               # W (or A,Bt) + packed consts
    outs = 2 * f_pad * 4
    return stream + pinned + outs


# ---------------------------------------------------------------------------
# kernels
# ---------------------------------------------------------------------------
def _pe_tile(spec, re, im, consts, out_ref, t_freq):
    """Shared elementwise tail: threshold -> rsqrt -> log2 -> lane partial sums."""
    tqb  = consts[0:1, :]    # threshold in quiet                       (1, F)
    wfr  = consts[1:2, :]    # 1/(B*T*k_band(f)), 0 on uncovered bins   (1, F)
    c15  = consts[2:3, :]    # 1.5 / k_band(f)  (the '2*' is folded in) (1, F)
    addf = consts[3:4, :]    # 1e-8 / (sum(SF)[band(f)] + 1e-8)         (1, F)
    t = jnp.maximum(t_freq + addf, tqb)                  # > 0 always
    s_inv = spec * lax.rsqrt(t * c15)                    # == 2*spec/sqrt(6*t/k)
    a = jnp.abs(re) * s_inv + 1.0
    b = jnp.abs(im) * s_inv + 1.0
    pe = jnp.log2(a * b)                                 # fused log2 pair
    # weighting hoisted out of the row reduction (saves tbt*F multiplies/tile)
    out_ref[...] = jnp.sum(pe, axis=0, keepdims=True) * wfr


def perceptual_entropy_dense_kernel(lm_ref, re_ref, im_ref, w_ref, const_ref, out_ref):
    spec = jnp.exp(jnp.minimum(lm_ref[...].astype(jnp.float32), 10.0))
    # masking threshold: ONE bf16 MXU matmul against the host-folded (F, F) W
    # (band membership, spreading, renormalization, band->freq broadcast all folded;
    #  the SFM/tonality offset cancels exactly between t and its renormalizer).
    t_freq = jnp.dot(spec.astype(jnp.bfloat16), w_ref[...],
                     preferred_element_type=jnp.float32)
    _pe_tile(spec, re_ref[...].astype(jnp.float32), im_ref[...].astype(jnp.float32),
             const_ref[...], out_ref, t_freq)


def perceptual_entropy_factored_kernel(lm_ref, re_ref, im_ref, a_ref, bt_ref,
                                       const_ref, out_ref):
    # rank-nb factorization of W (used for F >= 512): spec @ A (F,KI) then @ Bt (KI,F)
    spec = jnp.exp(jnp.minimum(lm_ref[...].astype(jnp.float32), 10.0))
    band = jnp.dot(spec.astype(jnp.bfloat16), a_ref[...],
                   preferred_element_type=jnp.float32)
    t_freq = jnp.dot(band.astype(jnp.bfloat16), bt_ref[...],
                     preferred_element_type=jnp.float32)
    _pe_tile(spec, re_ref[...].astype(jnp.float32), im_ref[...].astype(jnp.float32),
             const_ref[...], out_ref, t_freq)


# ---------------------------------------------------------------------------
# wrapper
# ---------------------------------------------------------------------------
def perceptual_entropy(log_magnitude, real, imag, spread_function,
                       psd_dict, bark_num, fs, win_len,
                       tile_bt=8192, force_factored=False):
    B, T, F = log_magnitude.shape
    nb = bark_num - 1
    BT = B * T
    F_pad = _round_up(F, 128)          # lane-dense frequency axis

    # ---- host-side constants (float64 math, cast once) ---------------------
    SF = np.asarray(spread_function, np.float64).reshape(nb, nb)
    inv_sumSF = 1.0 / (SF.sum(axis=0) + 1e-8)                       # (nb,)
    M = np.zeros((F_pad, nb), np.float64)
    kfreq = np.ones(F_pad, np.float64)
    wfr = np.zeros(F_pad, np.float64)
    addf = np.ones(F_pad, np.float64)   # 1.0 on uncovered/pad bins keeps rsqrt finite
    for i in range(1, bark_num):
        s, e = psd_dict[i]
        k = e - s + 1
        M[s - 1:s - 1 + k, i - 1] = 1.0
        kfreq[s - 1:s - 1 + k] = k
        wfr[s - 1:s - 1 + k] = 1.0 / (BT * k)
        addf[s - 1:s - 1 + k] = 1e-8 * inv_sumSF[i - 1]
    A = (M @ SF) * inv_sumSF[None, :]                               # (F_pad, nb)
    Wmat = A @ M.T                                                  # (F_pad, F_pad), rank<=nb
    tqb = np.ones(F_pad, np.float64)
    tqb[:F] = tq_np(np.arange(F), fs, win_len)
    consts = np.zeros((8, F_pad), np.float32)                       # pad to 8 sublanes
    consts[0] = tqb
    consts[1] = wfr
    consts[2] = 1.5 / kfreq
    consts[3] = addf

    use_factored = bool(force_factored) or F_pad >= 512
    KI = _round_up(nb, 128)
    if use_factored:
        A_pad = np.zeros((F_pad, KI), np.float64); A_pad[:, :nb] = A
        Bt_pad = np.zeros((KI, F_pad), np.float64); Bt_pad[:nb, :] = M.T
        mats = (jnp.asarray(A_pad, jnp.bfloat16), jnp.asarray(Bt_pad, jnp.bfloat16))
        w_bytes = 2 * F_pad * KI * 2
        kernel = perceptual_entropy_factored_kernel
        mat_specs = [pl.BlockSpec((F_pad, KI), lambda i: (0, 0)),
                     pl.BlockSpec((KI, F_pad), lambda i: (0, 0))]
    else:
        mats = (jnp.asarray(Wmat, jnp.bfloat16),)
        w_bytes = F_pad * F_pad * 2
        kernel = perceptual_entropy_dense_kernel
        mat_specs = [pl.BlockSpec((F_pad, F_pad), lambda i: (0, 0))]

    # ---- input streams: keep bf16 producers as bf16; never down-cast here --
    def _stream(x):
        x = jnp.asarray(x)
        if x.dtype not in (np.dtype(jnp.bfloat16), np.dtype(jnp.float32)):
            x = x.astype(jnp.float32)
        x = x.reshape(BT, F)
        if F_pad != F:
            x = jnp.pad(x, ((0, 0), (0, F_pad - F)))
        return x

    lm2, re2, im2 = _stream(log_magnitude), _stream(real), _stream(imag)
    isz = lm2.dtype.itemsize + re2.dtype.itemsize + im2.dtype.itemsize

    # ---- frame-axis tiling --------------------------------------------------
    tbt = max(8, min(_round_up(int(tile_bt), 8), _round_up(BT, 8)))
    two_step = (BT // 2) // 8 * 8        # keep >= 2 grid steps so v7x uses both TCs
    if two_step >= 8:
        tbt = min(tbt, two_step)
    budget = _vmem_budget_bytes()
    while tbt > 8 and _vmem_need_bytes(tbt, F_pad, isz, w_bytes) > int(budget * 0.9):
        tbt = max(8, (tbt // 2 + 7) // 8 * 8)
    n_full = BT // tbt
    rem = BT - n_full * tbt
    need = _vmem_need_bytes(tbt, F_pad, isz, w_bytes)
    vmem_limit = int(min(budget, max(32 << 20, int(need * 1.25) + (2 << 20))))

    loss = jnp.float32(0.0)
    if n_full > 0:
        grid_spec = pltpu.PrefetchScalarGridSpec(
            num_scalar_prefetch=0,
            grid=(n_full,),
            in_specs=[pl.BlockSpec((tbt, F_pad), lambda i: (i, 0)),
                      pl.BlockSpec((tbt, F_pad), lambda i: (i, 0)),
                      pl.BlockSpec((tbt, F_pad), lambda i: (i, 0))]
                     + mat_specs
                     + [pl.BlockSpec((8, F_pad), lambda i: (0, 0))],   # pinned consts
            out_specs=pl.BlockSpec((None, 1, F_pad), lambda i: (i, 0, 0)),
        )
        partials = pl.pallas_call(
            kernel,
            out_shape=jax.ShapeDtypeStruct((n_full, 1, F_pad), jnp.float32),
            grid_spec=grid_spec,
            compiler_params=pltpu.CompilerParams(
                dimension_semantics=("parallel",),
                vmem_limit_bytes=vmem_limit),
        )(lm2, re2, im2, *mats, jnp.asarray(consts))
        loss = loss + jnp.sum(partials)

    # ---- remainder frames (< tbt rows): tiny plain-XLA tail -----------------
    # Avoids both an HBM-sized pad copy and any reliance on partial-block reads.
    if rem > 0:
        sl = slice(n_full * tbt, BT)
        spec_t = jnp.exp(jnp.minimum(lm2[sl].astype(jnp.float32), 10.0))
        t_t = spec_t @ jnp.asarray(Wmat, jnp.float32) + jnp.asarray(addf, jnp.float32)
        t_t = jnp.maximum(t_t, jnp.asarray(tqb, jnp.float32))
        s_inv = spec_t * lax.rsqrt(t_t * jnp.asarray(consts[2]))
        a = jnp.abs(re2[sl].astype(jnp.float32)) * s_inv + 1.0
        b = jnp.abs(im2[sl].astype(jnp.float32)) * s_inv + 1.0
        loss = loss + jnp.sum(jnp.sum(jnp.log2(a * b), axis=0) * jnp.asarray(consts[1]))

    return 1.0 / (1.0 + loss)


# ---------------------------------------------------------------------------
# literal (numpy, float64) transcription of the PyTorch forward, for checking
# ---------------------------------------------------------------------------
def reference_np(logmag, real, imag, SF, psd, bark_num, Tq):
    spec = np.exp(np.clip(logmag.astype(np.float64), -1000, 10))
    real_p = real.astype(np.float64) * spec
    imag_p = imag.astype(np.float64) * spec
    B, T, F = spec.shape
    nb = bark_num - 1
    SF64 = SF.astype(np.float64)
    c_test = np.log10(np.ones((B, T, nb)) @ SF64 + 1e-8)
    renorm = {}
    for i in range(1, bark_num):
        s, e = psd[i]; k = e - s + 1
        band = spec[:, :, s - 1:s - 1 + k]
        geo = 10 ** (np.sum(np.log10(np.abs(band) + 1e-30), -1) / k)
        ari = np.mean(np.abs(band), -1)
        sfm = 10 * np.log10(geo / ari + 1e-8)
        alpha = np.minimum(sfm / -60, 1.0)
        offset = alpha * (14.5 + i) + (1 - alpha) * 5.5
        t = 10 ** (c_test[:, :, i - 1] + (-offset / 10))
        renorm[i] = np.repeat(t[..., None], k, -1)
    bsb = np.stack([spec[:, :, psd[i][0] - 1:psd[i][1]].sum(-1)
                    for i in range(1, bark_num)], -1)
    c = np.log10(bsb @ SF64 + 1e-8)
    loss = 0.0
    for i in range(1, bark_num):
        s, e = psd[i]; k = e - s + 1
        band = spec[:, :, s - 1:s - 1 + k]
        geo = 10 ** (np.sum(np.log10(np.abs(band) + 1e-30), -1) / k)
        ari = np.mean(np.abs(band), -1)
        sfm = 10 * np.log10(geo / ari + 1e-8)
        alpha = np.minimum(sfm / -60, 1.0)
        offset = alpha * (14.5 + i) + (1 - alpha) * 5.5
        t = 10 ** (c[:, :, i - 1] + (-offset / 10))
        t = np.repeat(t[..., None], k, -1)
        bound = Tq[s - 1:s - 1 + k][None, None, :]
        t = t / renorm[i]
        t = np.maximum(t, bound)
        denom = np.sqrt(6 * t / k)
        loss += np.mean(np.log2(2 * np.abs(real_p[:, :, s - 1:s - 1 + k] / denom) + 1))
        loss += np.mean(np.log2(2 * np.abs(imag_p[:, :, s - 1:s - 1 + k] / denom) + 1))
    return 1.0 / (1.0 + loss)


if __name__ == "__main__":
    # small, module-consistent config
    B, T = 2, 11
    fs, win_len = 16000, 256
    F = win_len // 2                       # 128 frequency bins
    bark_num = 9                           # 8 bark bands
    sizes = [4, 6, 8, 12, 16, 20, 26, 36]  # band widths, sum = 128
    psd_dict = {}
    start = 1
    for i, sz in enumerate(sizes, start=1):
        psd_dict[i] = (start, start + sz - 1)   # 1-indexed (start, end)
        start += sz
    nb = bark_num - 1
    idx = np.arange(nb)
    # deterministic spreading function (positive, Toeplitz-like)
    spread_function = np.power(10.0, -np.abs(idx[:, None] - idx[None, :])).astype(np.float32)

    key = jax.random.PRNGKey(0)
    k1, k2, k3 = jax.random.split(key, 3)
    log_magnitude = jax.random.normal(k1, (B, T, F), jnp.float32)
    real = jax.random.normal(k2, (B, T, F), jnp.float32)
    imag = jax.random.normal(k3, (B, T, F), jnp.float32)

    Tq = tq_np(np.arange(F), fs, win_len)
    ref = reference_np(np.asarray(log_magnitude), np.asarray(real), np.asarray(imag),
                       spread_function, psd_dict, bark_num, Tq)

    # dense-W path; tiny tile on purpose: exercises the multi-tile parallel grid
    # (2 kernel tiles of 8 frames) plus the plain-XLA remainder tail (6 frames).
    out = perceptual_entropy(log_magnitude, real, imag, spread_function,
                             psd_dict, bark_num, fs, win_len, tile_bt=8)
    out = jax.block_until_ready(out)
    assert np.allclose(float(out), float(ref), rtol=5e-3, atol=1e-4), (float(out), float(ref))

    # factored (rank-nb) path, as selected automatically once F >= 512
    out_f = perceptual_entropy(log_magnitude, real, imag, spread_function,
                               psd_dict, bark_num, fs, win_len, tile_bt=8,
                               force_factored=True)
    out_f = jax.block_until_ready(out_f)
    assert np.allclose(float(out_f), float(ref), rtol=5e-3, atol=1e-4), (float(out_f), float(ref))

    print("KERNEL_OK")
</pallas_src>

<mosaic_0001>
module attributes {stable_mosaic.version = 11 : i64} {
  func.func @perceptual_entropy_dense_kernel(%arg0: i32, %arg1: memref<8x128xf32, #tpu.memory_space<vmem>>, %arg2: memref<8x128xf32, #tpu.memory_space<vmem>>, %arg3: memref<8x128xf32, #tpu.memory_space<vmem>>, %arg4: memref<128x128xbf16, #tpu.memory_space<vmem>>, %arg5: memref<8x128xf32, #tpu.memory_space<vmem>>, %arg6: memref<1x1x128xf32, #tpu.memory_space<vmem>>) attributes {dimension_semantics = [#tpu.dimension_semantics<parallel>], iteration_bounds = array<i64: 2>, scalar_prefetch = 0 : i64, scratch_operands = 0 : i64, tpu.core_type = #tpu.core_type<tc>, window_params = [{transform_indices = @transform_0, window_bounds = array<i64: 8, 128>}, {transform_indices = @transform_1, window_bounds = array<i64: 8, 128>}, {transform_indices = @transform_2, window_bounds = array<i64: 8, 128>}, {pipeline_mode = #tpu.pipeline_mode<synchronous>, transform_indices = @transform_3, window_bounds = array<i64: 128, 128>}, {pipeline_mode = #tpu.pipeline_mode<synchronous>, transform_indices = @transform_4, window_bounds = array<i64: 8, 128>}, {transform_indices = @transform_5, window_bounds = array<i64: 1, 1, 128>}]} {
    %c0 = arith.constant 0 : index
    %c0_0 = arith.constant 0 : index
    %0 = vector.load %arg1[%c0, %c0_0] : memref<8x128xf32, #tpu.memory_space<vmem>>, vector<8x128xf32>
    %cst = arith.constant 1.000000e+01 : f32
    %1 = vector.broadcast %cst : f32 to vector<8x128xf32>
    %2 = arith.minimumf %0, %1 : vector<8x128xf32>
    %3 = math.exp %2 : vector<8x128xf32>
    %4 = arith.truncf %3 : vector<8x128xf32> to vector<8x128xbf16>
    %c0_1 = arith.constant 0 : index
    %c0_2 = arith.constant 0 : index
    %5 = vector.load %arg4[%c0_1, %c0_2] : memref<128x128xbf16, #tpu.memory_space<vmem>>, vector<128x128xbf16>
    %cst_3 = arith.constant dense<0.000000e+00> : vector<8x128xf32>
    %6 = tpu.matmul %4, %5, %cst_3 {dimension_numbers = #tpu.dot_dimension_numbers<[1], [0], [0], [1], [0, 0, 1, 1], [], []>} : vector<8x128xbf16>, vector<128x128xbf16>, vector<8x128xf32> -> vector<8x128xf32>
    %c0_4 = arith.constant 0 : index
    %c0_5 = arith.constant 0 : index
    %7 = vector.load %arg2[%c0_4, %c0_5] : memref<8x128xf32, #tpu.memory_space<vmem>>, vector<8x128xf32>
    %c0_6 = arith.constant 0 : index
    %c0_7 = arith.constant 0 : index
    %8 = vector.load %arg3[%c0_6, %c0_7] : memref<8x128xf32, #tpu.memory_space<vmem>>, vector<8x128xf32>
    %c0_8 = arith.constant 0 : index
    %c0_9 = arith.constant 0 : index
    %9 = vector.load %arg5[%c0_8, %c0_9] : memref<8x128xf32, #tpu.memory_space<vmem>>, vector<8x128xf32>
    %10 = vector.extract_strided_slice %9 {offsets = [0, 0], sizes = [1, 128], strides = [1, 1]} : vector<8x128xf32> to vector<1x128xf32>
    %11 = vector.extract_strided_slice %9 {offsets = [1, 0], sizes = [1, 128], strides = [1, 1]} : vector<8x128xf32> to vector<1x128xf32>
    %12 = vector.extract_strided_slice %9 {offsets = [2, 0], sizes = [1, 128], strides = [1, 1]} : vector<8x128xf32> to vector<1x128xf32>
    %13 = vector.extract_strided_slice %9 {offsets = [3, 0], sizes = [1, 128], strides = [1, 1]} : vector<8x128xf32> to vector<1x128xf32>
    %14 = vector.broadcast %13 : vector<1x128xf32> to vector<8x128xf32>
    %15 = arith.addf %6, %14 : vector<8x128xf32>
    %16 = vector.broadcast %10 : vector<1x128xf32> to vector<8x128xf32>
    %17 = arith.maximumf %15, %16 : vector<8x128xf32>
    %18 = vector.broadcast %12 : vector<1x128xf32> to vector<8x128xf32>
    %19 = arith.mulf %17, %18 : vector<8x128xf32>
    %20 = math.rsqrt %19 : vector<8x128xf32>
    %21 = arith.mulf %3, %20 : vector<8x128xf32>
    %22 = math.absf %7 : vector<8x128xf32>
    %23 = arith.mulf %22, %21 : vector<8x128xf32>
    %cst_10 = arith.constant 1.000000e+00 : f32
    %24 = vector.broadcast %cst_10 : f32 to vector<8x128xf32>
    %25 = arith.addf %23, %24 : vector<8x128xf32>
    %26 = math.absf %8 : vector<8x128xf32>
    %27 = arith.mulf %26, %21 : vector<8x128xf32>
    %cst_11 = arith.constant 1.000000e+00 : f32
    %28 = vector.broadcast %cst_11 : f32 to vector<8x128xf32>
    %29 = arith.addf %27, %28 : vector<8x128xf32>
    %30 = arith.mulf %25, %29 : vector<8x128xf32>
    %31 = math.log %30 : vector<8x128xf32>
    %cst_12 = arith.constant 2.000000e+00 : f32
    %32 = math.log %cst_12 : f32
    %33 = vector.broadcast %32 : f32 to vector<8x128xf32>
    %34 = arith.divf %31, %33 : vector<8x128xf32>
    %cst_13 = arith.constant dense<0.000000e+00> : vector<128xf32>
    %35 = vector.multi_reduction <add>, %34, %cst_13 [0] : vector<8x128xf32> to vector<128xf32>
    %36 = vector.shape_cast %35 : vector<128xf32> to vector<1x128xf32>
    %37 = arith.mulf %36, %11 : vector<1x128xf32>
    %c0_14 = arith.constant 0 : index
    %c0_15 = arith.constant 0 : index
    %c0_16 = arith.constant 0 : index
    %38 = vector.load %arg6[%c0_14, %c0_15, %c0_16] : memref<1x1x128xf32, #tpu.memory_space<vmem>>, vector<1x1x128xf32>
    %39 = vector.shape_cast %38 : vector<1x1x128xf32> to vector<1x128xf32>
    %40 = vector.shape_cast %37 : vector<1x128xf32> to vector<1x1x128xf32>
    tpu.vector_store %arg6[%c0_14, %c0_15, %c0_16], %40 {strides = array<i32>} : memref<1x1x128xf32, #tpu.memory_space<vmem>>, vector<1x1x128xf32>,
    return
  }
  func.func @transform_0(%arg0: i32) -> (i32, i32) {
    %c0_i32 = arith.constant 0 : i32
    %c0_i32_0 = arith.constant 0 : i32
    return %arg0, %c0_i32 : i32, i32
  }
  func.func @transform_1(%arg0: i32) -> (i32, i32) {
    %c0_i32 = arith.constant 0 : i32
    %c0_i32_0 = arith.constant 0 : i32
    return %arg0, %c0_i32 : i32, i32
  }
  func.func @transform_2(%arg0: i32) -> (i32, i32) {
    %c0_i32 = arith.constant 0 : i32
    %c0_i32_0 = arith.constant 0 : i32
    return %arg0, %c0_i32 : i32, i32
  }
  func.func @transform_3(%arg0: i32) -> (i32, i32) {
    %c0_i32 = arith.constant 0 : i32
    %c0_i32_0 = arith.constant 0 : i32
    %c0_i32_1 = arith.constant 0 : i32
    return %c0_i32, %c0_i32_0 : i32, i32
  }
  func.func @transform_4(%arg0: i32) -> (i32, i32) {
    %c0_i32 = arith.constant 0 : i32
    %c0_i32_0 = arith.constant 0 : i32
    %c0_i32_1 = arith.constant 0 : i32
    return %c0_i32, %c0_i32_0 : i32, i32
  }
  func.func @transform_5(%arg0: i32) -> (i32, i32, i32) {
    %c0_i32 = arith.constant 0 : i32
    %c0_i32_0 = arith.constant 0 : i32
    %c0_i32_1 = arith.constant 0 : i32
    return %arg0, %c0_i32, %c0_i32_0 : i32, i32, i32
  }
}

</mosaic_0001>

<llo_original>
// kernel: tpu_custom_call.1
$region0: #{tpu_custom_call.1}
  #allocation0 [shape = 'u32[]', space=smem, size = 0x4, offset = 0x4, fixed_abs, tag = 'smem constant byte address 0x4 - core index']
  #allocation1 [shape = 'u32[144,128]{1,0:T(1,128)}', space=vmem, size = 0x12000, scoped, tag = 'internal scratch']
  %s0 = inlined_call_operand.hbm [shape: f32[22,128], index: 0, kind: input, shape index: {}]
  %s1 = inlined_call_operand.hbm [shape: f32[22,128], index: 1, kind: input, shape index: {}]
  %s2 = inlined_call_operand.hbm [shape: f32[22,128], index: 2, kind: input, shape index: {}]
  %s3 = inlined_call_operand.hbm [shape: bf16[128,128], index: 3, kind: input, shape index: {}]
  %s4 = inlined_call_operand.hbm [shape: f32[8,128], index: 4, kind: input, shape index: {}]
  %s5 = inlined_call_operand.hbm [shape: f32[2,1,128], index: 5, kind: output, shape index: {}]
  %s6 = sld [smem:[#allocation0]]
  $region73: #{tpu_custom_call.1} parent=0
    _
  %s8 = ssub.s32 1, %s6
  %s9 = scalar_select 0, %s8, %s6
  $region1: #{tpu_custom_call.1} parent=0
    #allocation2 [shape = 'u8[8192]{0}', space=vmem, size = 0x2000, scoped, tag = 'input window, operand 0']
    #allocation3 [shape = 's32[2]{0}', space=sflag, size = 0x8, scoped, tag = 'scoped memory for tpu_custom_call.1']
    #allocation4 [shape = 's32[2]{0}', space=sflag, size = 0x8, scoped, tag = 'scoped memory for tpu_custom_call.1']
    #allocation5 [shape = 'u8[8192]{0}', space=vmem, size = 0x2000, scoped, tag = 'input window, operand 1']
    #allocation6 [shape = 's32[2]{0}', space=sflag, size = 0x8, scoped, tag = 'scoped memory for tpu_custom_call.1']
    #allocation7 [shape = 'u8[8192]{0}', space=vmem, size = 0x2000, scoped, tag = 'input window, operand 2']
    #allocation8 [shape = 'u8[32768]{0}', space=vmem, size = 0x8000, scoped, tag = 'input window, operand 3, single buffered']
    #allocation9 [shape = 's32[1]{0}', space=sflag, size = 0x4, scoped, tag = 'scoped memory for tpu_custom_call.1']
    #allocation10 [shape = 'u8[4096]{0}', space=vmem, size = 0x1000, scoped, tag = 'input window, operand 4, single buffered']
    #allocation11 [shape = 'u8[1024]{0}', space=vmem, size = 0x400, scoped, tag = 'output window, operand 0']
    %10 = vsyncpa [#allocation3], 0
    %s11 = scalar_lea.sflag [#allocation3], 1
    %12 = vsyncpa %s11, 0
    %13 = vsyncpa [#allocation6], 0
    %s14 = scalar_lea.sflag [#allocation6], 1
    %15 = vsyncpa %s14, 0
    %16 = vsyncpa [#allocation9], 0
    %17 = vsyncpa [#allocation4], 0
    %s18 = scalar_lea.sflag [#allocation4], 1
    %19 = vsyncpa %s18, 0
    loop: start=0, step=1, limit=4
    $region2: #{tpu_custom_call.1} parent=1 // loop_pre_header
      _
    $region3: #{tpu_custom_call.1} parent=1 // loop_header
      %s21 = sphi 0, %s25
      %p22 = scmp.ge.s32.totalorder %s21, 4
      %s31 = sphi 0, %s33
      %s34 = sphi 0, %s31
      %s35 = sphi 0, %s34
      %s51 = sphi 0, %s35
      %s57 = sphi 0, %s59
      %s60 = sphi 0, %s57
      %s61 = sphi 0, %s60
      %s77 = sphi 0, %s61
      %s83 = sphi 0, %s85
      %s86 = sphi 0, %s83
      %s87 = sphi 0, %s86
      %s103 = sphi 0, %s87
      %s107 = sphi 0, %s107
      %s109 = sphi 0, %s107
      %s110 = sphi 0, %s109
      %s124 = sphi 0, %s110
      %s128 = sphi 0, %s128
      %s130 = sphi 0, %s128
      %s131 = sphi 0, %s130
      %s145 = sphi 0, %s131
      %s151 = sphi 0, %s153
      %s154 = sphi 0, %s151
      %s155 = sphi 0, %s154
      %s171 = sphi 0, %s155
    $region4: #{tpu_custom_call.1} parent=1 // loop_header_branch
      %24 = sbr.rel (%p22) target = $region8
    $region5: #{tpu_custom_call.1} parent=1 // loop_body
      %s26 = ssub.s32 %s21, 1
      %s27 = ssub.s32 %s21, 2
      %s28 = sadd.s32 %s21, 1
      %s29 = ssub.s32 %s21, %s28
      %p30 = scmp.eq.s32.totalorder %s29, 0
      %s32 = sadd.s32 %s31, 1
      %s33 = scalar_select %p30, %s31, %s32
      %p36 = pneg %p30
      %p37 = scmp.eq.s32.totalorder %s21, 1
      %p38 = por %p36, %p37
      %p39 = scmp.ne.s32.totalorder %s31, %s34
      %p40 = scmp.eq.s32.totalorder %s21, 0
      %p41 = por %p39, %p40
      %p42 = scmp.ne.s32.totalorder %s31, %s34
      %p43 = scmp.eq.s32.totalorder %s26, 1
      %p44 = por %p42, %p43
      %p45 = scmp.ne.s32.totalorder %s34, %s35
      %p46 = scmp.eq.s32.totalorder %s26, 0
      %p47 = por %p45, %p46
      %p48 = scmp.ne.s32.totalorder %s34, %s35
      %p49 = scmp.eq.s32.totalorder %s27, 1
      %p50 = por %p48, %p49
      %p52 = scmp.ne.s32.totalorder %s35, %s51
      %p53 = scmp.eq.s32.totalorder %s27, 0
      %p54 = por %p52, %p53
      %s55 = ssub.s32 %s21, %s28
      %p56 = scmp.eq.s32.totalorder %s55, 0
      %s58 = sadd.s32 %s57, 1
      %s59 = scalar_select %p56, %s57, %s58
      %p62 = pneg %p56
      %p63 = scmp.eq.s32.totalorder %s21, 1
      %p64 = por %p62, %p63
      %p65 = scmp.ne.s32.totalorder %s57, %s60
      %p66 = scmp.eq.s32.totalorder %s21, 0
      %p67 = por %p65, %p66
      %p68 = scmp.ne.s32.totalorder %s57, %s60
      %p69 = scmp.eq.s32.totalorder %s26, 1
      %p70 = por %p68, %p69
      %p71 = scmp.ne.s32.totalorder %s60, %s61
      %p72 = scmp.eq.s32.totalorder %s26, 0
      %p73 = por %p71, %p72
      %p74 = scmp.ne.s32.totalorder %s60, %s61
      %p75 = scmp.eq.s32.totalorder %s27, 1
      %p76 = por %p74, %p75
      %p78 = scmp.ne.s32.totalorder %s61, %s77
      %p79 = scmp.eq.s32.totalorder %s27, 0
      %p80 = por %p78, %p79
      %s81 = ssub.s32 %s21, %s28
      %p82 = scmp.eq.s32.totalorder %s81, 0
      %s84 = sadd.s32 %s83, 1
      %s85 = scalar_select %p82, %s83, %s84
      %p88 = pneg %p82
      %p89 = scmp.eq.s32.totalorder %s21, 1
      %p90 = por %p88, %p89
      %p91 = scmp.ne.s32.totalorder %s83, %s86
      %p92 = scmp.eq.s32.totalorder %s21, 0
      %p93 = por %p91, %p92
      %p94 = scmp.ne.s32.totalorder %s83, %s86
      %p95 = scmp.eq.s32.totalorder %s26, 1
      %p96 = por %p94, %p95
      %p97 = scmp.ne.s32.totalorder %s86, %s87
      %p98 = scmp.eq.s32.totalorder %s26, 0
      %p99 = por %p97, %p98
      %p100 = scmp.ne.s32.totalorder %s86, %s87
      %p101 = scmp.eq.s32.totalorder %s27, 1
      %p102 = por %p100, %p101
      %p104 = scmp.ne.s32.totalorder %s87, %s103
      %p105 = scmp.eq.s32.totalorder %s27, 0
      %p106 = por %p104, %p105
      %s108 = sadd.s32 %s107, 1
      %p111 = scmp.eq.s32.totalorder %s21, 1
      %p112 = scmp.ne.s32.totalorder %s107, %s109
      %p113 = scmp.eq.s32.totalorder %s21, 0
      %p114 = por %p112, %p113
      %p115 = scmp.ne.s32.totalorder %s107, %s109
      %p116 = scmp.eq.s32.totalorder %s26, 1
      %p117 = por %p115, %p116
      %p118 = scmp.ne.s32.totalorder %s109, %s110
      %p119 = scmp.eq.s32.totalorder %s26, 0
      %p120 = por %p118, %p119
      %p121 = scmp.ne.s32.totalorder %s109, %s110
      %p122 = scmp.eq.s32.totalorder %s27, 1
      %p123 = por %p121, %p122
      %p125 = scmp.ne.s32.totalorder %s110, %s124
      %p126 = scmp.eq.s32.totalorder %s27, 0
      %p127 = por %p125, %p126
      %s129 = sadd.s32 %s128, 1
      %p132 = scmp.eq.s32.totalorder %s21, 1
      %p133 = scmp.ne.s32.totalorder %s128, %s130
      %p134 = scmp.eq.s32.totalorder %s21, 0
      %p135 = por %p133, %p134
      %p136 = scmp.ne.s32.totalorder %s128, %s130
      %p137 = scmp.eq.s32.totalorder %s26, 1
      %p138 = por %p136, %p137
      %p139 = scmp.ne.s32.totalorder %s130, %s131
      %p140 = scmp.eq.s32.totalorder %s26, 0
      %p141 = por %p139, %p140
      %p142 = scmp.ne.s32.totalorder %s130, %s131
      %p143 = scmp.eq.s32.totalorder %s27, 1
      %p144 = por %p142, %p143
      %p146 = scmp.ne.s32.totalorder %s131, %s145
      %p147 = scmp.eq.s32.totalorder %s27, 0
      %p148 = por %p146, %p147
      %s149 = ssub.s32 %s21, %s28
      %p150 = scmp.eq.s32.totalorder %s149, 0
      %s152 = sadd.s32 %s151, 1
      %s153 = scalar_select %p150, %s151, %s152
      %p156 = pneg %p150
      %p157 = scmp.eq.s32.totalorder %s21, 1
      %p158 = por %p156, %p157
      %p159 = scmp.ne.s32.totalorder %s151, %s154
      %p160 = scmp.eq.s32.totalorder %s21, 0
      %p161 = por %p159, %p160
      %p162 = scmp.ne.s32.totalorder %s151, %s154
      %p163 = scmp.eq.s32.totalorder %s26, 1
      %p164 = por %p162, %p163
      %p165 = scmp.ne.s32.totalorder %s154, %s155
      %p166 = scmp.eq.s32.totalorder %s26, 0
      %p167 = por %p165, %p166
      %p168 = scmp.ne.s32.totalorder %s154, %s155
      %p169 = scmp.eq.s32.totalorder %s27, 1
      %p170 = por %p168, %p169
      %p172 = scmp.ne.s32.totalorder %s155, %s171
      %p173 = scmp.eq.s32.totalorder %s27, 0
      %p174 = por %p172, %p173
      %p175 = scmp.le.s32.totalorder 1, %s21
      %p176 = scmp.lt.s32.totalorder %s21, 3
      %p177 = pnand %p175, %p176
      %p178 = pneg %p177
      // Predicated region
      $region9: #{tpu_custom_call.1} parent=5 // pred_check
        _
      $region10: #{tpu_custom_call.1} parent=5 // pred_check_branch
        %180 = sbr.rel (%p177) target = $region12
      $region11: #{tpu_custom_call.1} parent=5 // pred_region
        %s181 = ssub.s32 %s21, 1
        // Predicated region
        $region13: #{tpu_custom_call.1} parent=11 // pred_check
          %p182 = pneg %p120
        $region14: #{tpu_custom_call.1} parent=11 // pred_check_branch
          %184 = sbr.rel (%p182) target = $region16
        $region15: #{tpu_custom_call.1} parent=11 // pred_region
          %s186 = ssub.s32 1024, 1024
          %187 = vsyncadd [#allocation9], %s186
          %s188 = sshll.u32 [#allocation8], 4
          %s189 = int_to_ptr.vmem [resolvable:$true] %s188
          %194 = dma.hbm_to_vmem [thread:$0]  %s3, 1024, %s189, [#allocation9], 64, 64, 4
        $region16: #{tpu_custom_call.1} parent=11 // pred_fallthru
          _
        // Predicated region
        $region17: #{tpu_custom_call.1} parent=11 // pred_check
          %p195 = pneg %p141
        $region18: #{tpu_custom_call.1} parent=11 // pred_check_branch
          %197 = sbr.rel (%p195) target = $region20
        $region19: #{tpu_custom_call.1} parent=11 // pred_region
          %s199 = ssub.s32 128, 128
          %200 = vsyncadd [#allocation9], %s199
          %s202 = sshll.u32 [#allocation10], 4
          %s203 = int_to_ptr.vmem [resolvable:$true] %s202
          %205 = dma.hbm_to_vmem [thread:$0]  %s4, 128, %s203, [#allocation9]
        $region20: #{tpu_custom_call.1} parent=11 // pred_fallthru
          _
      $region12: #{tpu_custom_call.1} parent=5 // pred_fallthru
        _
      %p206 = scmp.lt.s32.totalorder %s21, 2
      // Predicated region
      $region21: #{tpu_custom_call.1} parent=5 // pred_check
        %p207 = pneg %p206
      $region22: #{tpu_custom_call.1} parent=5 // pred_check_branch
        %209 = sbr.rel (%p207) target = $region24
      $region23: #{tpu_custom_call.1} parent=5 // pred_region
        // Predicated region
        $region25: #{tpu_custom_call.1} parent=23 // pred_check
          %p210 = pneg %p41
        $region26: #{tpu_custom_call.1} parent=23 // pred_check_branch
          %212 = sbr.rel (%p210) target = $region28
        $region27: #{tpu_custom_call.1} parent=23 // pred_region
          %s213 = sand.u32 %s31, 1
          %s214 = scalar_lea.sflag [#allocation3], %s213
          %s215 = sand.u32 %s31, 1
          %s216 = smul.addr %s215, 8
          %s217 = scalar_lea.vmem [#allocation2], %s216
          %s219 = ssub.s32 128, 128
          %220 = vsyncadd %s214, %s219
          %s221 = smul.addr %s21, 128
          %s222 = scalar_lea.hbm %s0, %s221
          %s224 = sshll.u32 %s217, 4
          %s225 = int_to_ptr.vmem [resolvable:$true] %s224
          %227 = dma.hbm_to_vmem [thread:$0]  %s222, 128, %s225, %s214
        $region28: #{tpu_custom_call.1} parent=23 // pred_fallthru
          _
        // Predicated region
        $region29: #{tpu_custom_call.1} parent=23 // pred_check
          %p228 = pneg %p67
        $region30: #{tpu_custom_call.1} parent=23 // pred_check_branch
          %230 = sbr.rel (%p228) target = $region32
        $region31: #{tpu_custom_call.1} parent=23 // pred_region
          %s231 = sand.u32 %s21, 1
          %s232 = scalar_lea.sflag [#allocation6], %s231
          %s233 = sand.u32 %s57, 1
          %s234 = smul.addr %s233, 8
          %s235 = scalar_lea.vmem [#allocation5], %s234
          %s237 = ssub.s32 128, 128
          %238 = vsyncadd %s232, %s237
          %s239 = smul.addr %s21, 128
          %s240 = scalar_lea.hbm %s1, %s239
          %s242 = sshll.u32 %s235, 4
          %s243 = int_to_ptr.vmem [resolvable:$true] %s242
          %245 = dma.hbm_to_vmem [thread:$0]  %s240, 128, %s243, %s232
        $region32: #{tpu_custom_call.1} parent=23 // pred_fallthru
          _
        // Predicated region
        $region33: #{tpu_custom_call.1} parent=23 // pred_check
          %p246 = pneg %p93
        $region34: #{tpu_custom_call.1} parent=23 // pred_check_branch
          %248 = sbr.rel (%p246) target = $region36
        $region35: #{tpu_custom_call.1} parent=23 // pred_region
          %s249 = sand.u32 %s21, 1
          %s250 = scalar_lea.sflag [#allocation6], %s249
          %s251 = sand.u32 %s83, 1
          %s252 = smul.addr %s251, 8
          %s253 = scalar_lea.vmem [#allocation7], %s252
          %s255 = ssub.s32 128, 128
          %256 = vsyncadd %s250, %s255
          %s257 = smul.addr %s21, 128
          %s258 = scalar_lea.hbm %s2, %s257
          %s260 = sshll.u32 %s253, 4
          %s261 = int_to_ptr.vmem [resolvable:$true] %s260
          %263 = dma.hbm_to_vmem [thread:$0]  %s258, 128, %s261, %s250
        $region36: #{tpu_custom_call.1} parent=23 // pred_fallthru
          _
      $region24: #{tpu_custom_call.1} parent=5 // pred_fallthru
        _
      %p264 = scmp.le.s32.totalorder 1, %s21
      %p265 = scmp.lt.s32.totalorder %s21, 3
      %p266 = pnand %p264, %p265
      %p267 = pneg %p266
      // Predicated region
      $region37: #{tpu_custom_call.1} parent=5 // pred_check
        _
      $region38: #{tpu_custom_call.1} parent=5 // pred_check_branch
        %269 = sbr.rel (%p266) target = $region40
      $region39: #{tpu_custom_call.1} parent=5 // pred_region
        %s270 = ssub.s32 %s21, 1
        %s271 = sand.u32 %s34, 1
        %s272 = scalar_lea.sflag [#allocation3], %s271
        %s273 = sand.u32 %s34, 1
        %s274 = smul.addr %s273, 8
        %s275 = scalar_lea.vmem [#allocation2], %s274
        // Predicated region
        $region41: #{tpu_custom_call.1} parent=39 // pred_check
          %p276 = pneg %p47
        $region42: #{tpu_custom_call.1} parent=39 // pred_check_branch
          %278 = sbr.rel (%p276) target = $region44
        $region43: #{tpu_custom_call.1} parent=39 // pred_region
          %279 = dma.done %s272, 128
        $region44: #{tpu_custom_call.1} parent=39 // pred_fallthru
          _
        %s280 = sand.u32 %s26, 1
        %s281 = scalar_lea.sflag [#allocation6], %s280
        %s282 = sand.u32 %s60, 1
        %s283 = smul.addr %s282, 8
        %s284 = scalar_lea.vmem [#allocation5], %s283
        // Predicated region
        $region45: #{tpu_custom_call.1} parent=39 // pred_check
          %p285 = pneg %p73
        $region46: #{tpu_custom_call.1} parent=39 // pred_check_branch
          %287 = sbr.rel (%p285) target = $region48
        $region47: #{tpu_custom_call.1} parent=39 // pred_region
          %288 = dma.done %s281, 128
        $region48: #{tpu_custom_call.1} parent=39 // pred_fallthru
          _
        %s289 = sand.u32 %s26, 1
        %s290 = scalar_lea.sflag [#allocation6], %s289
        %s291 = sand.u32 %s86, 1
        %s292 = smul.addr %s291, 8
        %s293 = scalar_lea.vmem [#allocation7], %s292
        // Predicated region
        $region49: #{tpu_custom_call.1} parent=39 // pred_check
          %p294 = pneg %p99
        $region50: #{tpu_custom_call.1} parent=39 // pred_check_branch
          %296 = sbr.rel (%p294) target = $region52
        $region51: #{tpu_custom_call.1} parent=39 // pred_region
          %297 = dma.done %s290, 128
        $region52: #{tpu_custom_call.1} parent=39 // pred_fallthru
          _
        // Predicated region
        $region53: #{tpu_custom_call.1} parent=39 // pred_check
          %p298 = pneg %p120
        $region54: #{tpu_custom_call.1} parent=39 // pred_check_branch
          %300 = sbr.rel (%p298) target = $region56
        $region55: #{tpu_custom_call.1} parent=39 // pred_region
          %301 = dma.done [#allocation9], 1024
        $region56: #{tpu_custom_call.1} parent=39 // pred_fallthru
          _
        // Predicated region
        $region57: #{tpu_custom_call.1} parent=39 // pred_check
          %p302 = pneg %p141
        $region58: #{tpu_custom_call.1} parent=39 // pred_check_branch
          %304 = sbr.rel (%p302) target = $region60
        $region59: #{tpu_custom_call.1} parent=39 // pred_region
          %305 = dma.done [#allocation9], 128
        $region60: #{tpu_custom_call.1} parent=39 // pred_fallthru
          _
        %s306 = sand.u32 %s34, 1
        %s307 = scalar_lea.sflag [#allocation3], %s306
        %s308 = sand.u32 %s34, 1
        %s309 = smul.addr %s308, 8
        %s310 = scalar_lea.vmem [#allocation2], %s309
        %p311 = pneg %p47
        %p312 = pneg %p44
        %s313 = sand.u32 %s26, 1
        %s314 = scalar_lea.sflag [#allocation6], %s313
        %s315 = sand.u32 %s60, 1
        %s316 = smul.addr %s315, 8
        %s317 = scalar_lea.vmem [#allocation5], %s316
        %p318 = pneg %p73
        %p319 = pneg %p70
        %s320 = sand.u32 %s26, 1
        %s321 = scalar_lea.sflag [#allocation6], %s320
        %s322 = sand.u32 %s86, 1
        %s323 = smul.addr %s322, 8
        %s324 = scalar_lea.vmem [#allocation7], %s323
        %p325 = pneg %p99
        %p326 = pneg %p96
        %p327 = pneg %p120
        %p328 = pneg %p117
        %p329 = pneg %p141
        %p330 = pneg %p138
        %p331 = pneg %p167
        %p332 = pneg %p164
        %s333 = sand.u32 %s154, 1
        %s334 = scalar_lea.sflag [#allocation4], %s333
        %s335 = sand.u32 %s154, 1
        %s336 = scalar_lea.vmem [#allocation11], %s335
        %v338 = vld [vmem:[%s275] sm:$0xff]
        %v339 = vmin.f32 %v338, 10.0
        %v340 = vmul.f32 %v339, 1.442695
        %v341 = vpow.pop %v340
        %v342 = vpack.c.bf16 %v341, %v341
        %v343 = vld [vmem:[#allocation8] sm:$0xf]
        %v344 = vld [vmem:[#allocation8 + $0x4] sm:$0xf]
        %v345 = vld [vmem:[#allocation8 + $0x8] sm:$0xf]
        %v346 = vld [vmem:[#allocation8 + $0xc] sm:$0xf]
        %v347 = vld [vmem:[#allocation8 + $0x10] sm:$0xf]
        %v348 = vld [vmem:[#allocation8 + $0x14] sm:$0xf]
        %v349 = vld [vmem:[#allocation8 + $0x18] sm:$0xf]
        %v350 = vld [vmem:[#allocation8 + $0x1c] sm:$0xf]
        %v351 = vld [vmem:[#allocation8 + $0x20] sm:$0xf]
        %v352 = vld [vmem:[#allocation8 + $0x24] sm:$0xf]
        %v353 = vld [vmem:[#allocation8 + $0x28] sm:$0xf]
        %v354 = vld [vmem:[#allocation8 + $0x2c] sm:$0xf]
        %v355 = vld [vmem:[#allocation8 + $0x30] sm:$0xf]
        %v356 = vld [vmem:[#allocation8 + $0x34] sm:$0xf]
        %v357 = vld [vmem:[#allocation8 + $0x38] sm:$0xf]
        %v358 = vld [vmem:[#allocation8 + $0x3c] sm:$0xf]
        %v359 = vld [vmem:[%s284] sm:$0xff]
        %v360 = vld [vmem:[%s293] sm:$0xff]
        %v361 = vld [vmem:[#allocation10] sm:$0xff]
        %v362 = vlaneseq
        %v363 = vshrl.u32 %v362, 7
        %v364 = vsub.s32 3, %v363
        %v365 = vrot.slane %v361, %v364
        %v382 = vunpack.c.l.b16 %v343
        %v383 = vunpack.c.l.b16 %v344
        %v384 = vunpack.c.l.b16 %v345
        %v385 = vunpack.c.l.b16 %v346
        %v386 = vunpack.c.l.b16 %v347
        %v387 = vunpack.c.l.b16 %v348
        %v388 = vunpack.c.l.b16 %v349
        %v389 = vunpack.c.l.b16 %v350
        %v390 = vunpack.c.l.b16 %v351
        %v391 = vunpack.c.l.b16 %v352
        %v392 = vunpack.c.l.b16 %v353
        %v393 = vunpack.c.l.b16 %v354
        %v394 = vunpack.c.l.b16 %v355
        %v395 = vunpack.c.l.b16 %v356
        %v396 = vunpack.c.l.b16 %v357
        %v397 = vunpack.c.l.b16 %v358
        %v398 = vpack.c.b16 %v383, %v382
        %v399 = vpack.c.b16 %v385, %v384
        %v400 = vpack.c.b16 %v387, %v386
        %v401 = vpack.c.b16 %v389, %v388
        %v402 = vpack.c.b16 %v391, %v390
        %v403 = vpack.c.b16 %v393, %v392
        %v404 = vpack.c.b16 %v395, %v394
        %v405 = vpack.c.b16 %v397, %v396
        %414 = vmatprep.subr.bf16.mxu0 0
        %415 = vmatpush1.bf16.msra.mxu0 %v405
        %416 = vmatprep.subr.bf16.mxu0 0
        %417 = vmatpush1.bf16.msra.mxu0 %v404
        %418 = vmatprep.subr.bf16.mxu0 0
        %419 = vmatpush1.bf16.msra.mxu0 %v403
        %420 = vmatprep.subr.bf16.mxu0 0
        %421 = vmatpush1.bf16.msra.mxu0 %v402
        %422 = vmatprep.subr.bf16.mxu0 0
        %423 = vmatpush1.bf16.msra.mxu0 %v401
        %424 = vmatprep.subr.bf16.mxu0 0
        %425 = vmatpush1.bf16.msra.mxu0 %v400
        %426 = vmatprep.subr.bf16.mxu0 0
        %427 = vmatpush1.bf16.msra.mxu0 %v399
        %428 = vmatprep.subr.bf16.mxu0 0
        %429 = vmatpush1.bf16.msra.mxu0 %v398
        %430 = vmatprep.subr.bf16.mxu0 0
        %431 = vmatpush2.bf16.msra.mxu0 0
        %432 = vmatprep.subr.bf16.mxu0 0
        %433 = vmatpush2.bf16.msra.mxu0 0
        %434 = vmatprep.subr.bf16.mxu0 0
        %435 = vmatpush2.bf16.msra.mxu0 0
        %436 = vmatprep.subr.bf16.mxu0 0
        %437 = vmatpush2.bf16.msra.mxu0 0
        %438 = vmatprep.subr.bf16.mxu0 0
        %439 = vmatpush2.bf16.msra.mxu0 0
        %440 = vmatprep.subr.bf16.mxu0 0
        %441 = vmatpush2.bf16.msra.mxu0 0
        %442 = vmatprep.subr.bf16.mxu0 0
        %443 = vmatpush2.bf16.msra.mxu0 0
        %444 = vmatprep.subr.bf16.mxu0 0
        %445 = vmatpush2.bf16.msra.mxu0 0
        %446 = vmatprep.mubr.bf16.mxu0 0
        %447 = vmatmul.mubr.bf16.gmra.mxu0 %v342
        %v448 = vpop.f32.mrf.mxu0
        %v449 = vadd.f32 %v365, %v448
        %v450 = vpop.f32.mrf.mxu0
        %v451 = vpop.f32.mrf.mxu0
        %v452 = vpop.f32.mrf.mxu0
        %453 = vdwg.mxu0
        %v454 = vlaneseq
        %v455 = vshrl.u32 %v454, 7
        %v456 = vsub.s32 0, %v455
        %v457 = vrot.slane %v361, %v456
        %v458 = vmax.f32 %v449, %v457
        %v459 = vlaneseq
        %v460 = vshrl.u32 %v459, 7
        %v461 = vsub.s32 2, %v460
        %v462 = vrot.slane %v361, %v461
        %v463 = vmul.f32 %v458, %v462
        %v464 = vrsqrt.pop %v463
        %v465 = vmul.f32 %v341, %v464
        %v466 = vand.u32 2147483647, %v359
        %v467 = vmul.f32 %v466, %v465
        %v468 = vadd.f32 %v467, 1.0
        %v469 = vand.u32 2147483647, %v360
        %v470 = vmul.f32 %v469, %v465
        %v471 = vadd.f32 %v470, 1.0
        %v472 = vmul.f32 %v468, %v471
        %v473 = vlog2.pop %v472
        %v474 = vmul.f32 %v473, 0.6931472
        %v475 = vrcp.pop 0.6931472
        %v476 = vmul.f32 %v474, %v475
        %v477 = vrot.slane %v476, 4
        %v478 = vadd.f32 %v476, %v477
        %v479 = vrot.slane %v478, 2
        %v480 = vadd.f32 %v478, %v479
        %v481 = vrot.slane %v480, 1
        %v482 = vadd.f32 %v480, %v481
        %v483 = vmul.f32 %v482, %v361
        %484 = vst [vmem:[%s336 - $0x1] sm:$0x2] %v483
        %s485 = sand.u32 %s154, 1
        %s486 = scalar_lea.sflag [#allocation4], %s485
        %s487 = sand.u32 %s154, 1
        %s488 = scalar_lea.vmem [#allocation11], %s487
        // Predicated region
        $region61: #{tpu_custom_call.1} parent=39 // pred_check
          %p489 = pneg %p164
        $region62: #{tpu_custom_call.1} parent=39 // pred_check_branch
          %491 = sbr.rel (%p489) target = $region64
        $region63: #{tpu_custom_call.1} parent=39 // pred_region
          %s493 = ssub.s32 16, 16
          %494 = vsyncadd %s486, %s493
          %s495 = smul.addr %s26, 16
          %s496 = scalar_lea.hbm %s5, %s495
          %s498 = sshll.u32 %s488, 4
          %s499 = int_to_ptr.vmem [resolvable:$true] %s498
          %501 = dma.vmem_to_hbm [thread:$0]  %s499, 16, %s496, %s486
        $region64: #{tpu_custom_call.1} parent=39 // pred_fallthru
          _
      $region40: #{tpu_custom_call.1} parent=5 // pred_fallthru
        _
      %p502 = scmp.le.s32.totalorder 2, %s21
      // Predicated region
      $region65: #{tpu_custom_call.1} parent=5 // pred_check
        %p503 = pneg %p502
      $region66: #{tpu_custom_call.1} parent=5 // pred_check_branch
        %505 = sbr.rel (%p503) target = $region68
      $region67: #{tpu_custom_call.1} parent=5 // pred_region
        %s506 = ssub.s32 %s21, 2
        // Predicated region
        $region69: #{tpu_custom_call.1} parent=67 // pred_check
          %p507 = pneg %p170
        $region70: #{tpu_custom_call.1} parent=67 // pred_check_branch
          %509 = sbr.rel (%p507) target = $region72
        $region71: #{tpu_custom_call.1} parent=67 // pred_region
          %s510 = sand.u32 %s155, 1
          %s511 = scalar_lea.sflag [#allocation4], %s510
          %s512 = sand.u32 %s155, 1
          %s513 = scalar_lea.vmem [#allocation11], %s512
          %514 = dma.done %s511, 16
        $region72: #{tpu_custom_call.1} parent=67 // pred_fallthru
          _
      $region68: #{tpu_custom_call.1} parent=5 // pred_fallthru
        _
    $region6: #{tpu_custom_call.1} parent=1 // loop_footer
      %s25 = sadd.s32 1, %s21
    $region7: #{tpu_custom_call.1} parent=1 // loop_footer_branch
      %20 = sbr.rel target = $region3
    $region8: #{tpu_custom_call.1} parent=1 // loop_exit
      _
    %515 = vsyncpa [#allocation3], 1
    %s516 = scalar_lea.sflag [#allocation3], 1
    %517 = vsyncpa %s516, 1
    %518 = vsyncpa [#allocation6], 1
    %s519 = scalar_lea.sflag [#allocation6], 1
    %520 = vsyncpa %s519, 1
    %521 = vsyncpa [#allocation9], 1
    %522 = vsyncpa [#allocation4], 1
    %s523 = scalar_lea.sflag [#allocation4], 1
    %524 = vsyncpa %s523, 1

</llo_original>
